<compile_context>
chip_gen: v7x
topology: tpu7x:2x2x1
jax: 0.10.0
libtpu: 0.0.40
codegen_flags: <defaults>
</compile_context>

<pallas_src>
import math
import jax
import jax.numpy as jnp
from jax.experimental import pallas as pl
from jax.experimental.pallas import tpu as pltpu


def hidden_attention_kernel(xk_ref, wk_ref, bk_ref, xq_ref, wq_ref, bq_ref,
                            out_ref, *, scale):
    # Full-sequence key projection (MXU): (S, D) @ (D, H) + (1, H) -> (S, H)
    key = jnp.dot(xk_ref[...], wk_ref[...],
                  preferred_element_type=jnp.float32) + bk_ref[...]

    # Row-tile query projection (MXU), with the 1/sqrt(H) scale folded in so
    # we never sweep the (TQ, S) score tile with a VPU multiply.
    query = (jnp.dot(xq_ref[...], wq_ref[...],
                     preferred_element_type=jnp.float32) + bq_ref[...]) * scale

    # Q · K^T without materializing key.T: contract the last dims directly on
    # the MXU (transposed operand), avoiding an XLU vxpose + extra temporary.
    scores = jax.lax.dot_general(
        query, key,
        dimension_numbers=(((1,), (1,)), ((), ())),
        preferred_element_type=jnp.float32)                     # (TQ, S)

    # Numerically stable softmax over the last dim; reciprocal on the EUP.
    m = jnp.max(scores, axis=-1, keepdims=True)
    e = jnp.exp(scores - m)
    denom = jnp.sum(e, axis=-1, keepdims=True)
    out_ref[...] = (e * pl.reciprocal(denom, approx=True)).astype(out_ref.dtype)


def _pick_row_tile(seq_len, max_tile=512):
    """Largest row tile (multiple of 8, divisor of S) bounded for v7x VMEM."""
    if seq_len <= max_tile:
        return seq_len
    for t in (512, 256, 128, 64, 32, 16, 8):
        if seq_len % t == 0:
            return t
    return seq_len  # ragged S: fall back to a single block


def hidden_attention_forward(x, wk, bk, wq, bq, hidden_size):
    """x: (1, S, D) float32; wk/wq: (D, H); bk/bq: (H,). Returns (S, S) probs."""
    x2d = jnp.squeeze(x, axis=0)              # matches query.squeeze(0) in PyTorch
    S, D = x2d.shape
    H = hidden_size
    bk2 = bk.reshape(1, H).astype(jnp.float32)
    bq2 = bq.reshape(1, H).astype(jnp.float32)

    tq = _pick_row_tile(S)
    n_row_tiles = S // tq
    scale = 1.0 / math.sqrt(hidden_size)

    kernel = lambda *refs: hidden_attention_kernel(*refs, scale=scale)

    return pl.pallas_call(
        kernel,
        out_shape=jax.ShapeDtypeStruct((S, S), jnp.float32),
        grid_spec=pl.GridSpec(
            grid=(n_row_tiles,),
            in_specs=[
                pl.BlockSpec((S, D), lambda i: (0, 0)),    # x (full, for K proj)
                pl.BlockSpec((D, H), lambda i: (0, 0)),    # Wk
                pl.BlockSpec((1, H), lambda i: (0, 0)),    # bk
                pl.BlockSpec((tq, D), lambda i: (i, 0)),   # x row tile (for Q proj)
                pl.BlockSpec((D, H), lambda i: (0, 0)),    # Wq
                pl.BlockSpec((1, H), lambda i: (0, 0)),    # bq
            ],
            out_specs=pl.BlockSpec((tq, S), lambda i: (i, 0)),
        ),
        compiler_params=pltpu.CompilerParams(
            # Row tiles are fully independent -> shard across TCs on v7x.
            dimension_semantics=("parallel",)),
    )(x2d, wk, bk2, x2d, wq, bq2)


if __name__ == "__main__":
    # Small shapes consistent with the module: seq=8, input_size=16, hidden=32.
    SEQ, INPUT_SIZE, HIDDEN_SIZE = 8, 16, 32

    key = jax.random.PRNGKey(0)
    k_x, k_wk, k_bk, k_wq, k_bq = jax.random.split(key, 5)

    x = jax.random.normal(k_x, (1, SEQ, INPUT_SIZE), dtype=jnp.float32)

    # Deterministic parameter init mimicking nn.Linear default uniform(-b, b).
    bound = 1.0 / math.sqrt(INPUT_SIZE)
    wk = jax.random.uniform(k_wk, (INPUT_SIZE, HIDDEN_SIZE), jnp.float32, -bound, bound)
    bk = jax.random.uniform(k_bk, (HIDDEN_SIZE,), jnp.float32, -bound, bound)
    wq = jax.random.uniform(k_wq, (INPUT_SIZE, HIDDEN_SIZE), jnp.float32, -bound, bound)
    bq = jax.random.uniform(k_bq, (HIDDEN_SIZE,), jnp.float32, -bound, bound)

    out = hidden_attention_forward(x, wk, bk, wq, bq, HIDDEN_SIZE)
    out = jax.block_until_ready(out)

    # Sanity check vs pure-JAX reference (approx reciprocal -> relaxed tol).
    x2d = jnp.squeeze(x, 0)
    ref_key = x2d @ wk + bk
    ref_query = x2d @ wq + bq
    ref_scores = (ref_query @ ref_key.T) / math.sqrt(HIDDEN_SIZE)
    ref = jax.nn.softmax(ref_scores, axis=-1)
    assert out.shape == (SEQ, SEQ)
    assert jnp.allclose(out, ref, atol=2e-3, rtol=2e-3), \
        f"max abs err = {jnp.max(jnp.abs(out - ref))}"

    print("KERNEL_OK")
</pallas_src>

<mosaic_0001>
module attributes {stable_mosaic.version = 11 : i64} {
  func.func @_lambda_(%arg0: i32, %arg1: memref<8x16xf32, #tpu.memory_space<vmem>>, %arg2: memref<16x32xf32, #tpu.memory_space<vmem>>, %arg3: memref<1x32xf32, #tpu.memory_space<vmem>>, %arg4: memref<8x16xf32, #tpu.memory_space<vmem>>, %arg5: memref<16x32xf32, #tpu.memory_space<vmem>>, %arg6: memref<1x32xf32, #tpu.memory_space<vmem>>, %arg7: memref<8x8xf32, #tpu.memory_space<vmem>>) attributes {dimension_semantics = [#tpu.dimension_semantics<parallel>], iteration_bounds = array<i64: 1>, scalar_prefetch = 0 : i64, scratch_operands = 0 : i64, tpu.core_type = #tpu.core_type<tc>, window_params = [{pipeline_mode = #tpu.pipeline_mode<synchronous>, transform_indices = @transform_0, window_bounds = array<i64: 8, 16>}, {pipeline_mode = #tpu.pipeline_mode<synchronous>, transform_indices = @transform_1, window_bounds = array<i64: 16, 32>}, {pipeline_mode = #tpu.pipeline_mode<synchronous>, transform_indices = @transform_2, window_bounds = array<i64: 1, 32>}, {transform_indices = @transform_3, window_bounds = array<i64: 8, 16>}, {pipeline_mode = #tpu.pipeline_mode<synchronous>, transform_indices = @transform_4, window_bounds = array<i64: 16, 32>}, {pipeline_mode = #tpu.pipeline_mode<synchronous>, transform_indices = @transform_5, window_bounds = array<i64: 1, 32>}, {transform_indices = @transform_6, window_bounds = array<i64: 8, 8>}]} {
    %c0 = arith.constant 0 : index
    %c0_0 = arith.constant 0 : index
    %0 = vector.load %arg1[%c0, %c0_0] : memref<8x16xf32, #tpu.memory_space<vmem>>, vector<8x16xf32>
    %c0_1 = arith.constant 0 : index
    %c0_2 = arith.constant 0 : index
    %1 = vector.load %arg2[%c0_1, %c0_2] : memref<16x32xf32, #tpu.memory_space<vmem>>, vector<16x32xf32>
    %cst = arith.constant dense<0.000000e+00> : vector<8x32xf32>
    %2 = tpu.matmul %0, %1, %cst {dimension_numbers = #tpu.dot_dimension_numbers<[1], [0], [0], [1], [0, 0, 1, 1], [], []>} : vector<8x16xf32>, vector<16x32xf32>, vector<8x32xf32> -> vector<8x32xf32>
    %c0_3 = arith.constant 0 : index
    %c0_4 = arith.constant 0 : index
    %3 = vector.load %arg3[%c0_3, %c0_4] : memref<1x32xf32, #tpu.memory_space<vmem>>, vector<1x32xf32>
    %4 = vector.broadcast %3 : vector<1x32xf32> to vector<8x32xf32>
    %5 = arith.addf %2, %4 : vector<8x32xf32>
    %c0_5 = arith.constant 0 : index
    %c0_6 = arith.constant 0 : index
    %6 = vector.load %arg4[%c0_5, %c0_6] : memref<8x16xf32, #tpu.memory_space<vmem>>, vector<8x16xf32>
    %c0_7 = arith.constant 0 : index
    %c0_8 = arith.constant 0 : index
    %7 = vector.load %arg5[%c0_7, %c0_8] : memref<16x32xf32, #tpu.memory_space<vmem>>, vector<16x32xf32>
    %cst_9 = arith.constant dense<0.000000e+00> : vector<8x32xf32>
    %8 = tpu.matmul %6, %7, %cst_9 {dimension_numbers = #tpu.dot_dimension_numbers<[1], [0], [0], [1], [0, 0, 1, 1], [], []>} : vector<8x16xf32>, vector<16x32xf32>, vector<8x32xf32> -> vector<8x32xf32>
    %c0_10 = arith.constant 0 : index
    %c0_11 = arith.constant 0 : index
    %9 = vector.load %arg6[%c0_10, %c0_11] : memref<1x32xf32, #tpu.memory_space<vmem>>, vector<1x32xf32>
    %10 = vector.broadcast %9 : vector<1x32xf32> to vector<8x32xf32>
    %11 = arith.addf %8, %10 : vector<8x32xf32>
    %cst_12 = arith.constant 0.176776692 : f32
    %12 = vector.broadcast %cst_12 : f32 to vector<8x32xf32>
    %13 = arith.mulf %11, %12 : vector<8x32xf32>
    %cst_13 = arith.constant dense<0.000000e+00> : vector<8x8xf32>
    %14 = tpu.matmul %13, %5, %cst_13 {dimension_numbers = #tpu.dot_dimension_numbers<[1], [1], [0], [0], [0, 0, 1, 0], [], []>} : vector<8x32xf32>, vector<8x32xf32>, vector<8x8xf32> -> vector<8x8xf32>
    %cst_14 = arith.constant dense<0xFF800000> : vector<8xf32>
    %15 = vector.multi_reduction <maximumf>, %14, %cst_14 [1] : vector<8x8xf32> to vector<8xf32>
    %16 = vector.shape_cast %15 : vector<8xf32> to vector<8x1xf32>
    %17 = vector.broadcast %16 : vector<8x1xf32> to vector<8x8xf32>
    %18 = arith.subf %14, %17 : vector<8x8xf32>
    %19 = math.exp %18 : vector<8x8xf32>
    %cst_15 = arith.constant dense<0.000000e+00> : vector<8xf32>
    %20 = vector.multi_reduction <add>, %19, %cst_15 [1] : vector<8x8xf32> to vector<8xf32>
    %21 = vector.shape_cast %20 : vector<8xf32> to vector<8x1xf32>
    %22 = tpu.reciprocal %21 {approx = true} : vector<8x1xf32> -> vector<8x1xf32>
    %23 = vector.broadcast %22 : vector<8x1xf32> to vector<8x8xf32>
    %24 = arith.mulf %19, %23 : vector<8x8xf32>
    %c0_16 = arith.constant 0 : index
    %c0_17 = arith.constant 0 : index
    %25 = vector.load %arg7[%c0_16, %c0_17] : memref<8x8xf32, #tpu.memory_space<vmem>>, vector<8x8xf32>
    tpu.vector_store %arg7[%c0_16, %c0_17], %24 {strides = array<i32>} : memref<8x8xf32, #tpu.memory_space<vmem>>, vector<8x8xf32>,
    return
  }
  func.func @transform_0(%arg0: i32) -> (i32, i32) {
    %c0_i32 = arith.constant 0 : i32
    %c0_i32_0 = arith.constant 0 : i32
    %c0_i32_1 = arith.constant 0 : i32
    return %c0_i32, %c0_i32_0 : i32, i32
  }
  func.func @transform_1(%arg0: i32) -> (i32, i32) {
    %c0_i32 = arith.constant 0 : i32
    %c0_i32_0 = arith.constant 0 : i32
    %c0_i32_1 = arith.constant 0 : i32
    return %c0_i32, %c0_i32_0 : i32, i32
  }
  func.func @transform_2(%arg0: i32) -> (i32, i32) {
    %c0_i32 = arith.constant 0 : i32
    %c0_i32_0 = arith.constant 0 : i32
    %c0_i32_1 = arith.constant 0 : i32
    return %c0_i32, %c0_i32_0 : i32, i32
  }
  func.func @transform_3(%arg0: i32) -> (i32, i32) {
    %c0_i32 = arith.constant 0 : i32
    %c0_i32_0 = arith.constant 0 : i32
    return %arg0, %c0_i32 : i32, i32
  }
  func.func @transform_4(%arg0: i32) -> (i32, i32) {
    %c0_i32 = arith.constant 0 : i32
    %c0_i32_0 = arith.constant 0 : i32
    %c0_i32_1 = arith.constant 0 : i32
    return %c0_i32, %c0_i32_0 : i32, i32
  }
  func.func @transform_5(%arg0: i32) -> (i32, i32) {
    %c0_i32 = arith.constant 0 : i32
    %c0_i32_0 = arith.constant 0 : i32
    %c0_i32_1 = arith.constant 0 : i32
    return %c0_i32, %c0_i32_0 : i32, i32
  }
  func.func @transform_6(%arg0: i32) -> (i32, i32) {
    %c0_i32 = arith.constant 0 : i32
    %c0_i32_0 = arith.constant 0 : i32
    return %arg0, %c0_i32 : i32, i32
  }
}

</mosaic_0001>

<llo_original>
// kernel: tpu_custom_call.1
$region0: #{tpu_custom_call.1}
  #allocation0 [shape = 'u32[]', space=smem, size = 0x4, offset = 0x4, fixed_abs, tag = 'smem constant byte address 0x4 - core index']
  #allocation1 [shape = 'u32[144,128]{1,0:T(1,128)}', space=vmem, size = 0x12000, scoped, tag = 'internal scratch']
  %s0 = inlined_call_operand.hbm [shape: f32[8,16], index: 0, kind: input, shape index: {}]
  %s1 = inlined_call_operand.hbm [shape: f32[16,32], index: 1, kind: input, shape index: {}]
  %s2 = inlined_call_operand.vmem [shape: f32[1,32], index: 2, kind: input, shape index: {}]
  %s3 = inlined_call_operand.vmem [shape: f32[8,16], index: 3, kind: input, shape index: {}]
  %s4 = inlined_call_operand.hbm [shape: f32[16,32], index: 4, kind: input, shape index: {}]
  %s5 = inlined_call_operand.vmem [shape: f32[1,32], index: 5, kind: input, shape index: {}]
  %s6 = inlined_call_operand.hbm [shape: f32[8,8], index: 6, kind: output, shape index: {}]
  %s7 = sld [smem:[#allocation0]]
  $region46: #{tpu_custom_call.1} parent=0
    _
  %s9 = ssub.s32 1, %s7
  %s10 = scalar_select 0, %s9, %s7
  $region1: #{tpu_custom_call.1} parent=0
    #allocation2 [shape = 'u8[4096]{0}', space=vmem, size = 0x1000, scoped, tag = 'input window, operand 0, single buffered']
    #allocation3 [shape = 's32[1]{0}', space=sflag, size = 0x4, scoped, tag = 'scoped memory for tpu_custom_call.1']
    #allocation4 [shape = 's32[1]{0}', space=sflag, size = 0x4, scoped, tag = 'scoped memory for tpu_custom_call.1']
    #allocation5 [shape = 'u8[8192]{0}', space=vmem, size = 0x2000, scoped, tag = 'input window, operand 1, single buffered']
    #allocation6 [shape = 's32[1]{0}', space=sflag, size = 0x4, scoped, tag = 'scoped memory for tpu_custom_call.1']
    #allocation7 [shape = 'u8[8192]{0}', space=vmem, size = 0x2000, scoped, tag = 'input window, operand 4, single buffered']
    #allocation8 [shape = 'u8[4096]{0}', space=vmem, size = 0x1000, scoped, tag = 'output window, operand 0, single buffered']
    %11 = vsyncpa [#allocation3], 0
    %12 = vsyncpa [#allocation6], 0
    %13 = vsyncpa [#allocation4], 0
    // Predicated region
    $region2: #{tpu_custom_call.1} parent=1 // pred_check
      _
    $region3: #{tpu_custom_call.1} parent=1 // pred_check_branch
      %15 = sbr.rel (0) target = $region5
    $region4: #{tpu_custom_call.1} parent=1 // pred_region
      %s17 = ssub.s32 128, 128
      %18 = vsyncadd [#allocation3], %s17
      %s20 = sshll.u32 [#allocation2], 4
      %s21 = int_to_ptr.vmem [resolvable:$true] %s20
      %23 = dma.hbm_to_vmem [thread:$0]  %s0, 128, %s21, [#allocation3]
    $region5: #{tpu_custom_call.1} parent=1 // pred_fallthru
      _
    // Predicated region
    $region6: #{tpu_custom_call.1} parent=1 // pred_check
      _
    $region7: #{tpu_custom_call.1} parent=1 // pred_check_branch
      %25 = sbr.rel (0) target = $region9
    $region8: #{tpu_custom_call.1} parent=1 // pred_region
      %s27 = ssub.s32 256, 256
      %28 = vsyncadd [#allocation6], %s27
      %s29 = sshll.u32 [#allocation5], 4
      %s30 = int_to_ptr.vmem [resolvable:$true] %s29
      %35 = dma.hbm_to_vmem [thread:$0]  %s1, 256, %s30, [#allocation6], 128, 128, 8
    $region9: #{tpu_custom_call.1} parent=1 // pred_fallthru
      _
    // Predicated region
    $region10: #{tpu_custom_call.1} parent=1 // pred_check
      _
    $region11: #{tpu_custom_call.1} parent=1 // pred_check_branch
      %37 = sbr.rel (0) target = $region13
    $region12: #{tpu_custom_call.1} parent=1 // pred_region
      _
    $region13: #{tpu_custom_call.1} parent=1 // pred_fallthru
      _
    // Predicated region
    $region14: #{tpu_custom_call.1} parent=1 // pred_check
      _
    $region15: #{tpu_custom_call.1} parent=1 // pred_check_branch
      %39 = sbr.rel (0) target = $region17
    $region16: #{tpu_custom_call.1} parent=1 // pred_region
      _
    $region17: #{tpu_custom_call.1} parent=1 // pred_fallthru
      _
    // Predicated region
    $region18: #{tpu_custom_call.1} parent=1 // pred_check
      _
    $region19: #{tpu_custom_call.1} parent=1 // pred_check_branch
      %41 = sbr.rel (0) target = $region21
    $region20: #{tpu_custom_call.1} parent=1 // pred_region
      %s43 = ssub.s32 256, 256
      %44 = vsyncadd [#allocation6], %s43
      %s45 = sshll.u32 [#allocation7], 4
      %s46 = int_to_ptr.vmem [resolvable:$true] %s45
      %51 = dma.hbm_to_vmem [thread:$0]  %s4, 256, %s46, [#allocation6], 128, 128, 8
    $region21: #{tpu_custom_call.1} parent=1 // pred_fallthru
      _
    // Predicated region
    $region22: #{tpu_custom_call.1} parent=1 // pred_check
      _
    $region23: #{tpu_custom_call.1} parent=1 // pred_check_branch
      %53 = sbr.rel (0) target = $region25
    $region24: #{tpu_custom_call.1} parent=1 // pred_region
      _
    $region25: #{tpu_custom_call.1} parent=1 // pred_fallthru
      _
    // Predicated region
    $region26: #{tpu_custom_call.1} parent=1 // pred_check
      _
    $region27: #{tpu_custom_call.1} parent=1 // pred_check_branch
      %55 = sbr.rel (0) target = $region29
    $region28: #{tpu_custom_call.1} parent=1 // pred_region
      %56 = dma.done [#allocation3], 128
    $region29: #{tpu_custom_call.1} parent=1 // pred_fallthru
      _
    // Predicated region
    $region30: #{tpu_custom_call.1} parent=1 // pred_check
      _
    $region31: #{tpu_custom_call.1} parent=1 // pred_check_branch
      %58 = sbr.rel (0) target = $region33
    $region32: #{tpu_custom_call.1} parent=1 // pred_region
      %59 = dma.done [#allocation6], 256
    $region33: #{tpu_custom_call.1} parent=1 // pred_fallthru
      _
    // Predicated region
    $region34: #{tpu_custom_call.1} parent=1 // pred_check
      _
    $region35: #{tpu_custom_call.1} parent=1 // pred_check_branch
      %61 = sbr.rel (0) target = $region37
    $region36: #{tpu_custom_call.1} parent=1 // pred_region
      %62 = dma.done [#allocation6], 256
    $region37: #{tpu_custom_call.1} parent=1 // pred_fallthru
      _
    %v63 = vld [vmem:[#allocation2] sm:$0xff]
    %v64 = vld [vmem:[#allocation5] sm:$0xff]
    %v65 = vld [vmem:[#allocation5 + $0x8] sm:$0xff]
    %v66 = vld [vmem:[%s2] sm:$0x1]
    %v68 = vlaneseq
    %v69 = vshrl.u32 %v68, 7
    %v70 = vsub.s32 0, %v69
    %v71 = vrot.slane %v66, %v70
    %vm73 = vcmask 130048
    %v75 = vsel %vm73, %v63, 0
    %77 = vmatprep.subr.mxu0 0.0
    %78 = vmatpush1.msra.mxu0 %v64
    %79 = vmatprep.subr.mxu0 0.0
    %80 = vmatpush1.msra.mxu0 %v65
    %81 = vmatprep.subr.mxu0 0.0
    %82 = vmatpush1.msra.mxu0 0.0
    %83 = vmatprep.subr.mxu0 0.0
    %84 = vmatpush1.msra.mxu0 0.0
    %85 = vmatprep.subr.mxu0 0.0
    %86 = vmatpush1.msra.mxu0 0.0
    %87 = vmatprep.subr.mxu0 0.0
    %88 = vmatpush1.msra.mxu0 0.0
    %89 = vmatprep.subr.mxu0 0.0
    %90 = vmatpush1.msra.mxu0 0.0
    %91 = vmatprep.subr.mxu0 0.0
    %92 = vmatpush1.msra.mxu0 0.0
    %93 = vmatprep.subr.mxu0 0.0
    %94 = vmatpush1.msra.mxu0 0.0
    %95 = vmatprep.subr.mxu0 0.0
    %96 = vmatpush1.msra.mxu0 0.0
    %97 = vmatprep.subr.mxu0 0.0
    %98 = vmatpush1.msra.mxu0 0.0
    %99 = vmatprep.subr.mxu0 0.0
    %100 = vmatpush1.msra.mxu0 0.0
    %101 = vmatprep.subr.mxu0 0.0
    %102 = vmatpush1.msra.mxu0 0.0
    %103 = vmatprep.subr.mxu0 0.0
    %104 = vmatpush1.msra.mxu0 0.0
    %105 = vmatprep.subr.mxu0 0.0
    %106 = vmatpush1.msra.mxu0 0.0
    %107 = vmatprep.subr.mxu0 0.0
    %108 = vmatpush1.msra.mxu0 0.0
    %109 = vmatprep.subr.mxu0 0.0
    %110 = vmatpush1.msra.mxu0 0.0
    %111 = vmatprep.subr.mxu0 0.0
    %112 = vmatpush1.msra.mxu0 0.0
    %113 = vmatprep.subr.mxu0 0.0
    %114 = vmatpush1.msra.mxu0 0.0
    %115 = vmatprep.subr.mxu0 0.0
    %116 = vmatpush1.msra.mxu0 0.0
    %117 = vmatprep.subr.mxu0 0.0
    %118 = vmatpush1.msra.mxu0 0.0
    %119 = vmatprep.subr.mxu0 0.0
    %120 = vmatpush1.msra.mxu0 0.0
    %121 = vmatprep.subr.mxu0 0.0
    %122 = vmatpush1.msra.mxu0 0.0
    %123 = vmatprep.subr.mxu0 0.0
    %124 = vmatpush1.msra.mxu0 0.0
    %125 = vmatprep.subr.mxu0 0.0
    %126 = vmatpush1.msra.mxu0 0.0
    %127 = vmatprep.subr.mxu0 0.0
    %128 = vmatpush1.msra.mxu0 0.0
    %129 = vmatprep.subr.mxu0 0.0
    %130 = vmatpush1.msra.mxu0 0.0
    %131 = vmatprep.subr.mxu0 0.0
    %132 = vmatpush1.msra.mxu0 0.0
    %133 = vmatprep.subr.mxu0 0.0
    %134 = vmatpush1.msra.mxu0 0.0
    %135 = vmatprep.subr.mxu0 0.0
    %136 = vmatpush1.msra.mxu0 0.0
    %137 = vmatprep.subr.mxu0 0.0
    %138 = vmatpush1.msra.mxu0 0.0
    %139 = vmatprep.subr.mxu0 0.0
    %140 = vmatpush1.msra.mxu0 0.0
    %141 = vmatprep.mubr.f32.mxu0 0.0
    %142 = vmatmul.mubr.f32.gmra.mrb[0].mxu0 %v75
    %v143 = vpop.f32.mrb[0].mxu0
    %v144 = vadd.f32 %v71, %v143
    %v145 = vpop.f32.mrb[0].mxu0
    %146 = vdwg.mxu0
    %v147 = vld [vmem:[%s3] sm:$0xff]
    %v148 = vld [vmem:[#allocation7] sm:$0xff]
    %v149 = vld [vmem:[#allocation7 + $0x8] sm:$0xff]
    %v150 = vld [vmem:[%s5] sm:$0x1]
    %v152 = vlaneseq
    %v153 = vshrl.u32 %v152, 7
    %v154 = vsub.s32 0, %v153
    %v155 = vrot.slane %v150, %v154
    %v158 = vsel %vm73, %v147, 0
    %160 = vmatprep.subr.mxu0 0.0
    %161 = vmatpush1.msra.mxu0 %v148
    %162 = vmatprep.subr.mxu0 0.0
    %163 = vmatpush1.msra.mxu0 %v149
    %164 = vmatprep.subr.mxu0 0.0
    %165 = vmatpush1.msra.mxu0 0.0
    %166 = vmatprep.subr.mxu0 0.0
    %167 = vmatpush1.msra.mxu0 0.0
    %168 = vmatprep.subr.mxu0 0.0
    %169 = vmatpush1.msra.mxu0 0.0
    %170 = vmatprep.subr.mxu0 0.0
    %171 = vmatpush1.msra.mxu0 0.0
    %172 = vmatprep.subr.mxu0 0.0
    %173 = vmatpush1.msra.mxu0 0.0
    %174 = vmatprep.subr.mxu0 0.0
    %175 = vmatpush1.msra.mxu0 0.0
    %176 = vmatprep.subr.mxu0 0.0
    %177 = vmatpush1.msra.mxu0 0.0
    %178 = vmatprep.subr.mxu0 0.0
    %179 = vmatpush1.msra.mxu0 0.0
    %180 = vmatprep.subr.mxu0 0.0
    %181 = vmatpush1.msra.mxu0 0.0
    %182 = vmatprep.subr.mxu0 0.0
    %183 = vmatpush1.msra.mxu0 0.0
    %184 = vmatprep.subr.mxu0 0.0
    %185 = vmatpush1.msra.mxu0 0.0
    %186 = vmatprep.subr.mxu0 0.0
    %187 = vmatpush1.msra.mxu0 0.0
    %188 = vmatprep.subr.mxu0 0.0
    %189 = vmatpush1.msra.mxu0 0.0
    %190 = vmatprep.subr.mxu0 0.0
    %191 = vmatpush1.msra.mxu0 0.0
    %192 = vmatprep.subr.mxu0 0.0
    %193 = vmatpush1.msra.mxu0 0.0
    %194 = vmatprep.subr.mxu0 0.0
    %195 = vmatpush1.msra.mxu0 0.0
    %196 = vmatprep.subr.mxu0 0.0
    %197 = vmatpush1.msra.mxu0 0.0
    %198 = vmatprep.subr.mxu0 0.0
    %199 = vmatpush1.msra.mxu0 0.0
    %200 = vmatprep.subr.mxu0 0.0
    %201 = vmatpush1.msra.mxu0 0.0
    %202 = vmatprep.subr.mxu0 0.0
    %203 = vmatpush1.msra.mxu0 0.0
    %204 = vmatprep.subr.mxu0 0.0
    %205 = vmatpush1.msra.mxu0 0.0
    %206 = vmatprep.subr.mxu0 0.0
    %207 = vmatpush1.msra.mxu0 0.0
    %208 = vmatprep.subr.mxu0 0.0
    %209 = vmatpush1.msra.mxu0 0.0
    %210 = vmatprep.subr.mxu0 0.0
    %211 = vmatpush1.msra.mxu0 0.0
    %212 = vmatprep.subr.mxu0 0.0
    %213 = vmatpush1.msra.mxu0 0.0
    %214 = vmatprep.subr.mxu0 0.0
    %215 = vmatpush1.msra.mxu0 0.0
    %216 = vmatprep.subr.mxu0 0.0
    %217 = vmatpush1.msra.mxu0 0.0
    %218 = vmatprep.subr.mxu0 0.0
    %219 = vmatpush1.msra.mxu0 0.0
    %220 = vmatprep.subr.mxu0 0.0
    %221 = vmatpush1.msra.mxu0 0.0
    %222 = vmatprep.subr.mxu0 0.0
    %223 = vmatpush1.msra.mxu0 0.0
    %224 = vmatprep.mubr.f32.mxu0 0.0
    %225 = vmatmul.mubr.f32.gmra.mrb[0].mxu0 %v158
    %v226 = vpop.f32.mrb[0].mxu0
    %v227 = vadd.f32 %v155, %v226
    %v228 = vpop.f32.mrb[0].mxu0
    %229 = vdwg.mxu0
    %v230 = vmul.f32 %v227, 0.17677669
    %vm231 = vcmask 261120
    %v233 = vsel %vm231, %v230, 0
    %v236 = vsel %vm231, %v144, 0
    %238 = vmatprep.subr.mxu0 0.0
    %239 = vmatpush1.xpose.msra.mxu0 %v236
    %240 = vmatprep.subr.mxu0 0.0
    %241 = vmatpush1.xpose.msra.mxu0 0.0
    %242 = vmatprep.subr.mxu0 0.0
    %243 = vmatpush1.xpose.msra.mxu0 0.0
    %244 = vmatprep.subr.mxu0 0.0
    %245 = vmatpush1.xpose.msra.mxu0 0.0
    %246 = vmatprep.subr.mxu0 0.0
    %247 = vmatpush1.xpose.msra.mxu0 0.0
    %248 = vmatprep.subr.mxu0 0.0
    %249 = vmatpush1.xpose.msra.mxu0 0.0
    %250 = vmatprep.subr.mxu0 0.0
    %251 = vmatpush1.xpose.msra.mxu0 0.0
    %252 = vmatprep.subr.mxu0 0.0
    %253 = vmatpush1.xpose.msra.mxu0 0.0
    %254 = vmatprep.subr.mxu0 0.0
    %255 = vmatpush1.xpose.msra.mxu0 0.0
    %256 = vmatprep.subr.mxu0 0.0
    %257 = vmatpush1.xpose.msra.mxu0 0.0
    %258 = vmatprep.subr.mxu0 0.0
    %259 = vmatpush1.xpose.msra.mxu0 0.0
    %260 = vmatprep.subr.mxu0 0.0
    %261 = vmatpush1.xpose.msra.mxu0 0.0
    %262 = vmatprep.subr.mxu0 0.0
    %263 = vmatpush1.xpose.msra.mxu0 0.0
    %264 = vmatprep.subr.mxu0 0.0
    %265 = vmatpush1.xpose.msra.mxu0 0.0
    %266 = vmatprep.subr.mxu0 0.0
    %267 = vmatpush1.xpose.msra.mxu0 0.0
    %268 = vmatprep.subr.mxu0 0.0
    %269 = vmatpush1.xpose.msra.mxu0 0.0
    %270 = vmatprep.subr.mxu0 0.0
    %271 = vmatpush1.xpose.msra.mxu0 0.0
    %272 = vmatprep.subr.mxu0 0.0
    %273 = vmatpush1.xpose.msra.mxu0 0.0
    %274 = vmatprep.subr.mxu0 0.0
    %275 = vmatpush1.xpose.msra.mxu0 0.0
    %276 = vmatprep.subr.mxu0 0.0
    %277 = vmatpush1.xpose.msra.mxu0 0.0
    %278 = vmatprep.subr.mxu0 0.0
    %279 = vmatpush1.xpose.msra.mxu0 0.0
    %280 = vmatprep.subr.mxu0 0.0
    %281 = vmatpush1.xpose.msra.mxu0 0.0
    %282 = vmatprep.subr.mxu0 0.0
    %283 = vmatpush1.xpose.msra.mxu0 0.0
    %284 = vmatprep.subr.mxu0 0.0
    %285 = vmatpush1.xpose.msra.mxu0 0.0
    %286 = vmatprep.subr.mxu0 0.0
    %287 = vmatpush1.xpose.msra.mxu0 0.0
    %288 = vmatprep.subr.mxu0 0.0
    %289 = vmatpush1.xpose.msra.mxu0 0.0
    %290 = vmatprep.subr.mxu0 0.0
    %291 = vmatpush1.xpose.msra.mxu0 0.0
    %292 = vmatprep.subr.mxu0 0.0
    %293 = vmatpush1.xpose.msra.mxu0 0.0
    %294 = vmatprep.subr.mxu0 0.0
    %295 = vmatpush1.xpose.msra.mxu0 0.0
    %296 = vmatprep.subr.mxu0 0.0
    %297 = vmatpush1.xpose.msra.mxu0 0.0
    %298 = vmatprep.subr.mxu0 0.0
    %299 = vmatpush1.xpose.msra.mxu0 0.0
    %300 = vmatprep.subr.mxu0 0.0
    %301 = vmatpush1.xpose.msra.mxu0 0.0
    %302 = vmatprep.mubr.f32.mxu0 0.0
    %303 = vmatmul.mubr.f32.gmra.mrb[0].mxu0 %v233
    %v304 = vpop.f32.mrb[0].mxu0
    %v305 = vadd.f32 0.0, %v304
    %v306 = vpop.f32.mrb[0].mxu0
    %307 = vdwg.mxu0
    %vm308 = vcmask 64512
    %v309 = vsel %vm308, %v305, -inf
    %310 = vmax.xlane.f32.xlu0 %v309
    %v311 = vpop.xlane.xlu0 %310
    %v312 = vsub.f32 %v305, %v311
    %v313 = vmul.f32 %v312, 1.442695
    %v314 = vpow.pop %v313
    %v315 = vsel %vm308, %v314, 0.0
    %316 = vadd.xlane.f32.xlu0 %v315
    %v317 = vpop.xlane.xlu0 %316
    %v318 = vrcp.pop %v317
    %v319 = vmul.f32 %v314, %v318
    %320 = vst.msk [vmem:[#allocation8] sm:$0xff] %vm308, %v319
    // Predicated region
    $region38: #{tpu_custom_call.1} parent=1 // pred_check
      _
    $region39: #{tpu_custom_call.1} parent=1 // pred_check_branch
      %322 = sbr.rel (0) target = $region41
    $region40: #{tpu_custom_call.1} parent=1 // pred_region
      %s324 = ssub.s32 128, 128
      %325 = vsyncadd [#allocation4], %s324
      %s327 = sshll.u32 [#allocation8], 4
      %s328 = int_to_ptr.vmem [resolvable:$true] %s327
      %330 = dma.vmem_to_hbm [thread:$0]  %s328, 128, %s6, [#allocation4]
    $region41: #{tpu_custom_call.1} parent=1 // pred_fallthru
      _
    // Predicated region
    $region42: #{tpu_custom_call.1} parent=1 // pred_check
      _
    $region43: #{tpu_custom_call.1} parent=1 // pred_check_branch
      %332 = sbr.rel (0) target = $region45
    $region44: #{tpu_custom_call.1} parent=1 // pred_region
      %333 = dma.done [#allocation4], 128
    $region45: #{tpu_custom_call.1} parent=1 // pred_fallthru
      _
    %334 = vsyncpa [#allocation3], 1
    %335 = vsyncpa [#allocation6], 1
    %336 = vsyncpa [#allocation4], 1

</llo_original>
